<compile_context>
chip_gen: v7x
topology: tpu7x:2x2x1
jax: 0.10.0
libtpu: 0.0.40
codegen_flags: <defaults>
</compile_context>

<pallas_src>
import functools

import jax
import jax.numpy as jnp
from jax.experimental import pallas as pl
from jax.experimental.pallas import tpu as pltpu

_TK_MAX = 512  # Fin-reduction tile for the projection matmuls.


def _round_up(x, m):
    return ((x + m - 1) // m) * m


def _pad2(x, rows, cols):
    return jnp.pad(x, ((0, rows - x.shape[0]), (0, cols - x.shape[1])))


def _chip_budget():
    """(tm_max, ts_max, vmem_limit_bytes) — conservative, with VMEM headroom."""
    cap = 64 * 1024 * 1024
    try:
        cap = int(getattr(pltpu.get_tpu_info(), "vmem_capacity_bytes", cap)) or cap
    except Exception:
        pass
    # Never request more than ~48 MiB of scoped VMEM: leaves headroom on v7x
    # (64 MiB / TensorCore) and is well above the small defaults on v5e/v6e.
    vmem_limit = min(48 * 1024 * 1024, int(cap * 3 // 4))
    if cap >= 96 * 1024 * 1024:       # v5e / v6e: 128 MiB VMEM -> bigger tiles
        return 512, 1024, vmem_limit
    return 256, 512, vmem_limit       # v7x: 64 MiB per TensorCore


# --------------------------------------------------------------------------
# Kernels
# --------------------------------------------------------------------------
def _matmul_kernel(x_ref, w_ref, o_ref, acc_ref):
    """o = x @ w with the Fin reduction tiled over grid axis 1 (f32 accum)."""
    k = pl.program_id(1)

    @pl.when(k == 0)
    def _init():
        acc_ref[...] = jnp.zeros_like(acc_ref)

    acc_ref[...] += jnp.dot(x_ref[...], w_ref[...],
                            preferred_element_type=jnp.float32)

    @pl.when(k == pl.num_programs(1) - 1)
    def _finalize():
        o_ref[...] = acc_ref[...].astype(o_ref.dtype)


def sage_aggregate_kernel(a_ref, hw_ref, hself_ref, invdeg_ref, b_ref,
                          out_ref, acc_ref, *, apply_relu):
    """acc = sum_k A01_tile @ HW_tile ; out = acc * (1/deg) + HSELF + bias."""
    k = pl.program_id(1)

    @pl.when(k == 0)
    def _init():
        acc_ref[...] = jnp.zeros_like(acc_ref)

    # {0,1} int8 adjacency -> bf16 on the VPU, MXU matmul with f32 accumulation.
    a_bf16 = a_ref[...].astype(jnp.bfloat16)
    acc_ref[...] += jnp.dot(a_bf16, hw_ref[...],
                            preferred_element_type=jnp.float32)

    @pl.when(k == pl.num_programs(1) - 1)
    def _finalize():
        # Exact f32 mean scaling + hoisted self path + bias, then activation.
        out = acc_ref[...] * invdeg_ref[...] + hself_ref[...] + b_ref[...]
        if apply_relu:
            out = jnp.maximum(out, 0.0)
        out_ref[...] = out.astype(out_ref.dtype)


# --------------------------------------------------------------------------
# Wrappers
# --------------------------------------------------------------------------
def _project(h_p, w_p, *, n_rows, row_tile, k_tile, out_dtype, vmem_limit):
    """[n_rows, Fout_pad] = h_p[:n_rows] @ w_p (h_p may carry extra pad rows)."""
    fin_pad, fout_pad = w_p.shape
    grid = (n_rows // row_tile, fin_pad // k_tile)
    out_bytes = jnp.dtype(out_dtype).itemsize
    return pl.pallas_call(
        _matmul_kernel,
        out_shape=jax.ShapeDtypeStruct((n_rows, fout_pad), out_dtype),
        grid=grid,
        in_specs=[
            pl.BlockSpec((row_tile, k_tile), lambda i, k: (i, k)),
            pl.BlockSpec((k_tile, fout_pad), lambda i, k: (k, 0)),
        ],
        out_specs=pl.BlockSpec((row_tile, fout_pad), lambda i, k: (i, 0)),
        scratch_shapes=[pltpu.VMEM((row_tile, fout_pad), jnp.float32)],
        compiler_params=pltpu.CompilerParams(
            dimension_semantics=("parallel", "arbitrary"),
            vmem_limit_bytes=vmem_limit),
        cost_estimate=pl.CostEstimate(
            flops=2 * n_rows * fin_pad * fout_pad,
            transcendentals=0,
            bytes_accessed=n_rows * fin_pad * 2
            + grid[0] * fin_pad * fout_pad * 2
            + n_rows * fout_pad * out_bytes),
    )(h_p, w_p)


def prepare_params(params):
    """Pad + cast SAGEConv parameters once (outside the per-layer hot loop)."""
    prepared = []
    for w_self, w_neigh, bias in params:
        fin, fout = w_self.shape
        tk = min(_TK_MAX, _round_up(fin, 128))
        fin_pad = _round_up(fin, tk)
        fout_pad = _round_up(fout, 128)
        prepared.append(dict(
            fin=fin, fout=fout, fin_pad=fin_pad, fout_pad=fout_pad, tk=tk,
            w_self=_pad2(w_self, fin_pad, fout_pad).astype(jnp.bfloat16),
            w_neigh=_pad2(w_neigh, fin_pad, fout_pad).astype(jnp.bfloat16),
            bias=_pad2(bias.reshape(1, -1), 1, fout_pad).astype(jnp.float32),
        ))
    return prepared


def prepare_block(a01, deg, tm_max, ts_max):
    """Pad the {0,1} adjacency (int8) and build the exact f32 1/deg column."""
    D, S = a01.shape
    TM = min(tm_max, _round_up(D, 32))   # mult of 32: int8 / bf16 sublane-native
    TS = min(ts_max, _round_up(S, 128))
    d_pad = _round_up(D, TM)
    s_pad = _round_up(S, TS)
    a_p = _pad2(a01.astype(jnp.int8), d_pad, s_pad)
    inv_deg = (1.0 / jnp.maximum(deg.astype(jnp.float32), 1.0)).reshape(-1, 1)
    inv_deg_p = _pad2(inv_deg, d_pad, 1)
    return dict(a=a_p, inv_deg=inv_deg_p, D=D, S=S,
                TM=TM, TS=TS, d_pad=d_pad, s_pad=s_pad)


def sage_layer(blk, h, prm, *, apply_relu, out_dtype, vmem_limit):
    D, S = blk["D"], blk["S"]
    TM, TS = blk["TM"], blk["TS"]
    d_pad, s_pad = blk["d_pad"], blk["s_pad"]
    fout = prm["fout"]
    fin_pad, fout_pad, tk = prm["fin_pad"], prm["fout_pad"], prm["tk"]

    # Activations padded once per layer (bf16 halves the H / HW DMA traffic).
    r_pad = max(s_pad, d_pad)
    h_p = _pad2(h[:S].astype(jnp.bfloat16), r_pad, fin_pad)

    # Hoisted projections: each computed once, not once per output-row tile.
    hw = _project(h_p, prm["w_neigh"], n_rows=s_pad, row_tile=TS, k_tile=tk,
                  out_dtype=jnp.bfloat16, vmem_limit=vmem_limit)
    hself = _project(h_p, prm["w_self"], n_rows=d_pad, row_tile=TM, k_tile=tk,
                     out_dtype=jnp.float32, vmem_limit=vmem_limit)

    grid = (d_pad // TM, s_pad // TS)
    out_bytes = jnp.dtype(out_dtype).itemsize
    kernel = functools.partial(sage_aggregate_kernel, apply_relu=apply_relu)

    # TODO(synk): mark the k-invariant blocks (HSELF, inv_deg, bias) with
    # pipeline_mode=pl.Buffered(1) once single-buffering is verified on the
    # target jax build; the aggregation kernel no longer holds any weights, so
    # the remaining VMEM saving is small.
    out = pl.pallas_call(
        kernel,
        out_shape=jax.ShapeDtypeStruct((d_pad, fout_pad), out_dtype),
        grid=grid,
        in_specs=[
            pl.BlockSpec((TM, TS), lambda m, k: (m, k)),         # A01 (int8)
            pl.BlockSpec((TS, fout_pad), lambda m, k: (k, 0)),   # HW (bf16)
            pl.BlockSpec((TM, fout_pad), lambda m, k: (m, 0)),   # HSELF (f32)
            pl.BlockSpec((TM, 1), lambda m, k: (m, 0)),          # 1/deg (f32)
            pl.BlockSpec((1, fout_pad), lambda m, k: (0, 0)),    # bias (f32)
        ],
        out_specs=pl.BlockSpec((TM, fout_pad), lambda m, k: (m, 0)),
        scratch_shapes=[pltpu.VMEM((TM, fout_pad), jnp.float32)],
        compiler_params=pltpu.CompilerParams(
            # On v7x the "parallel" m axis lets the two TensorCores split
            # output-row tiles; harmless on single-TC v5e/v6e.
            dimension_semantics=("parallel", "arbitrary"),
            vmem_limit_bytes=vmem_limit),
        cost_estimate=pl.CostEstimate(
            flops=2 * d_pad * s_pad * fout_pad,
            transcendentals=0,
            bytes_accessed=d_pad * s_pad                       # int8 A, read once
            + grid[0] * s_pad * fout_pad * 2                   # HW re-streamed per m
            + d_pad * fout_pad * (4 + out_bytes)               # HSELF + out
            + d_pad * 4 + fout_pad * 4),
    )(blk["a"], hw, hself, blk["inv_deg"], prm["bias"])

    return out[:D, :fout]


def sage_forward(prep_blocks, x, prep_params, *, vmem_limit):
    """prep_blocks from prepare_block, prep_params from prepare_params."""
    n_layers = len(prep_params)
    h = x
    for l, (blk, prm) in enumerate(zip(prep_blocks, prep_params)):
        last = (l == n_layers - 1)
        h = sage_layer(blk, h, prm, apply_relu=not last,
                       out_dtype=jnp.float32 if last else jnp.bfloat16,
                       vmem_limit=vmem_limit)
        # TODO(synk): training-mode dropout (identity in eval) would use
        # pltpu.prng_seed / pltpu.prng_random_bits inside the kernel.
    return h


# --------------------------------------------------------------------------
# Pure-JAX reference + test harness
# --------------------------------------------------------------------------
def sage_reference(blocks, x, params):
    """Pure-JAX f32 reference (DGL SAGEConv 'mean' semantics)."""
    n_layers = len(params)
    h = x
    for l, ((a01, deg), (w_self, w_neigh, bias)) in enumerate(zip(blocks, params)):
        D = a01.shape[0]
        h_dst = h[:D]
        h_neigh = (a01.astype(jnp.float32) @ h) / jnp.maximum(deg, 1.0)[:, None]
        h = h_dst @ w_self + h_neigh @ w_neigh + bias
        if l != n_layers - 1:
            h = jnp.maximum(h, 0.0)
    return h


def make_block(key, num_dst, num_src):
    """Random bipartite block: {0,1} adjacency [num_dst, num_src] + in-degrees."""
    adj = jax.random.uniform(key, (num_dst, num_src)) < 0.25
    # dst nodes are the first num_dst src nodes in a DGL block; keep self edge
    adj = adj.at[jnp.arange(num_dst), jnp.arange(num_dst)].set(True)
    a01 = adj.astype(jnp.int8)
    deg = jnp.sum(adj.astype(jnp.float32), axis=1)
    return a01, deg


def make_linear(key, fan_in, fan_out):
    # deterministic Xavier-ish init; weights stored [in, out] (transposed nn.Linear)
    return jax.random.normal(key, (fan_in, fan_out), jnp.float32) / jnp.sqrt(fan_in)


if __name__ == "__main__":
    in_feats, n_hidden, n_classes, n_layers = 16, 32, 8, 3

    # node counts per block: src -> dst (dst nodes are a prefix of src nodes)
    src_sizes = [64, 32, 16]
    dst_sizes = [32, 16, 8]
    feat_sizes = [in_feats] + [n_hidden] * (n_layers - 1) + [n_classes]

    root = jax.random.PRNGKey(0)
    k_x, k_blocks, k_params = jax.random.split(root, 3)

    # input features
    x = jax.random.normal(k_x, (src_sizes[0], in_feats), jnp.float32)

    # blocks ({0,1} adjacency + degrees)
    bkeys = jax.random.split(k_blocks, n_layers)
    blocks = [make_block(bkeys[l], dst_sizes[l], src_sizes[l])
              for l in range(n_layers)]

    # SAGEConv parameters: (W_self, W_neigh, bias) per layer
    pkeys = jax.random.split(k_params, 2 * n_layers)
    params = []
    for l in range(n_layers):
        fin, fout = feat_sizes[l], feat_sizes[l + 1]
        w_self = make_linear(pkeys[2 * l], fin, fout)
        w_neigh = make_linear(pkeys[2 * l + 1], fin, fout)
        bias = jnp.zeros((1, fout), jnp.float32)
        params.append((w_self, w_neigh, bias))

    # One-time preparation (padding / casting) outside the per-layer loop.
    tm_max, ts_max, vmem_limit = _chip_budget()
    prep_blocks = [prepare_block(a01, deg, tm_max, ts_max) for a01, deg in blocks]
    prep_params = prepare_params(params)

    out = sage_forward(prep_blocks, x, prep_params, vmem_limit=vmem_limit)
    out = jax.block_until_ready(out)

    ref = sage_reference(blocks, x, params)
    assert out.shape == (dst_sizes[-1], n_classes), out.shape

    # bf16 activations/weights with f32 accumulation -> loosened tolerance
    err = float(jnp.max(jnp.abs(out.astype(jnp.float32) - ref)))
    scale = float(jnp.max(jnp.abs(ref))) + 1e-6
    assert err <= 0.1 * scale, f"mismatch vs JAX reference: err={err}, scale={scale}"

    print("KERNEL_OK")
</pallas_src>

<mosaic_0001>
module attributes {stable_mosaic.version = 11 : i64} {
  func.func @_matmul_kernel(%arg0: i32, %arg1: i32, %arg2: memref<128x128xbf16, #tpu.memory_space<vmem>>, %arg3: memref<128x128xbf16, #tpu.memory_space<vmem>>, %arg4: memref<128x128xbf16, #tpu.memory_space<vmem>>, %arg5: memref<128x128xf32, #tpu.memory_space<vmem>>) attributes {dimension_semantics = [#tpu.dimension_semantics<parallel>, #tpu.dimension_semantics<arbitrary>], iteration_bounds = array<i64: 1, 1>, scalar_prefetch = 0 : i64, scratch_operands = 1 : i64, tpu.core_type = #tpu.core_type<tc>, window_params = [{transform_indices = @transform_0, window_bounds = array<i64: 128, 128>}, {transform_indices = @transform_1, window_bounds = array<i64: 128, 128>}, {transform_indices = @transform_2, window_bounds = array<i64: 128, 128>}]} {
    %c0_i32 = arith.constant 0 : i32
    %0 = arith.cmpi eq, %arg1, %c0_i32 : i32
    %1 = arith.extui %0 : i1 to i32
    %c0_i32_0 = arith.constant 0 : i32
    %2 = arith.cmpi ne, %1, %c0_i32_0 : i32
    scf.if %2 {
      %cst_10 = arith.constant 0.000000e+00 : f32
      %12 = vector.broadcast %cst_10 : f32 to vector<128x128xf32>
      %c0_11 = arith.constant 0 : index
      %c0_12 = arith.constant 0 : index
      %13 = vector.load %arg5[%c0_11, %c0_12] : memref<128x128xf32, #tpu.memory_space<vmem>>, vector<128x128xf32>
      tpu.vector_store %arg5[%c0_11, %c0_12], %12 {strides = array<i32>} : memref<128x128xf32, #tpu.memory_space<vmem>>, vector<128x128xf32>,
    } else {
    }
    %c0 = arith.constant 0 : index
    %c0_1 = arith.constant 0 : index
    %3 = vector.load %arg5[%c0, %c0_1] : memref<128x128xf32, #tpu.memory_space<vmem>>, vector<128x128xf32>
    %c0_2 = arith.constant 0 : index
    %c0_3 = arith.constant 0 : index
    %4 = vector.load %arg2[%c0_2, %c0_3] : memref<128x128xbf16, #tpu.memory_space<vmem>>, vector<128x128xbf16>
    %c0_4 = arith.constant 0 : index
    %c0_5 = arith.constant 0 : index
    %5 = vector.load %arg3[%c0_4, %c0_5] : memref<128x128xbf16, #tpu.memory_space<vmem>>, vector<128x128xbf16>
    %cst = arith.constant dense<0.000000e+00> : vector<128x128xf32>
    %6 = tpu.matmul %4, %5, %cst {dimension_numbers = #tpu.dot_dimension_numbers<[1], [0], [0], [1], [0, 0, 1, 1], [], []>} : vector<128x128xbf16>, vector<128x128xbf16>, vector<128x128xf32> -> vector<128x128xf32>
    %7 = arith.addf %3, %6 : vector<128x128xf32>
    %c0_6 = arith.constant 0 : index
    %c0_7 = arith.constant 0 : index
    %8 = vector.load %arg5[%c0_6, %c0_7] : memref<128x128xf32, #tpu.memory_space<vmem>>, vector<128x128xf32>
    tpu.vector_store %arg5[%c0_6, %c0_7], %7 {strides = array<i32>} : memref<128x128xf32, #tpu.memory_space<vmem>>, vector<128x128xf32>,
    %c0_i32_8 = arith.constant 0 : i32
    %9 = arith.cmpi eq, %arg1, %c0_i32_8 : i32
    %10 = arith.extui %9 : i1 to i32
    %c0_i32_9 = arith.constant 0 : i32
    %11 = arith.cmpi ne, %10, %c0_i32_9 : i32
    scf.if %11 {
      %c0_10 = arith.constant 0 : index
      %c0_11 = arith.constant 0 : index
      %12 = vector.load %arg5[%c0_10, %c0_11] : memref<128x128xf32, #tpu.memory_space<vmem>>, vector<128x128xf32>
      %13 = arith.truncf %12 : vector<128x128xf32> to vector<128x128xbf16>
      %c0_12 = arith.constant 0 : index
      %c0_13 = arith.constant 0 : index
      %14 = vector.load %arg4[%c0_12, %c0_13] : memref<128x128xbf16, #tpu.memory_space<vmem>>, vector<128x128xbf16>
      tpu.vector_store %arg4[%c0_12, %c0_13], %13 {strides = array<i32>} : memref<128x128xbf16, #tpu.memory_space<vmem>>, vector<128x128xbf16>,
    } else {
    }
    return
  }
  func.func @transform_0(%arg0: i32, %arg1: i32) -> (i32, i32) {
    %c0_i32 = arith.constant 0 : i32
    return %arg0, %arg1 : i32, i32
  }
  func.func @transform_1(%arg0: i32, %arg1: i32) -> (i32, i32) {
    %c0_i32 = arith.constant 0 : i32
    %c0_i32_0 = arith.constant 0 : i32
    return %arg1, %c0_i32 : i32, i32
  }
  func.func @transform_2(%arg0: i32, %arg1: i32) -> (i32, i32) {
    %c0_i32 = arith.constant 0 : i32
    %c0_i32_0 = arith.constant 0 : i32
    return %arg0, %c0_i32 : i32, i32
  }
}

</mosaic_0001>

<llo_original>
// kernel: tpu_custom_call.1
$region0: #{tpu_custom_call.1}
  #allocation0 [shape = 'u32[]', space=smem, size = 0x4, offset = 0x4, fixed_abs, tag = 'smem constant byte address 0x4 - core index']
  #allocation1 [shape = 'u32[144,128]{1,0:T(1,128)}', space=vmem, size = 0x12000, scoped, tag = 'internal scratch']
  #allocation2 [shape = 'f32[128,128]{1,0:T(8,128)}', space=vmem, size = 0x10000, scoped, tag = 'scratch operand']
  %s0 = inlined_call_operand.hbm [shape: bf16[128,128], index: 0, kind: input, shape index: {}]
  %s1 = inlined_call_operand.hbm [shape: bf16[128,128], index: 1, kind: input, shape index: {}]
  %s2 = inlined_call_operand.hbm [shape: bf16[128,128], index: 2, kind: output, shape index: {}]
  %s3 = sld [smem:[#allocation0]]
  $region34: #{tpu_custom_call.1} parent=0
    _
  %s5 = ssub.s32 1, %s3
  %s6 = scalar_select 0, %s5, %s3
  $region1: #{tpu_custom_call.1} parent=0
    #allocation3 [shape = 'u8[32768]{0}', space=vmem, size = 0x8000, scoped, tag = 'input window, operand 0, single buffered']
    #allocation4 [shape = 's32[1]{0}', space=sflag, size = 0x4, scoped, tag = 'scoped memory for tpu_custom_call.1']
    #allocation5 [shape = 's32[1]{0}', space=sflag, size = 0x4, scoped, tag = 'scoped memory for tpu_custom_call.1']
    #allocation6 [shape = 'u8[32768]{0}', space=vmem, size = 0x8000, scoped, tag = 'input window, operand 1, single buffered']
    #allocation7 [shape = 's32[1]{0}', space=sflag, size = 0x4, scoped, tag = 'scoped memory for tpu_custom_call.1']
    #allocation8 [shape = 'u8[32768]{0}', space=vmem, size = 0x8000, scoped, tag = 'output window, operand 0, single buffered']
    %7 = vsyncpa [#allocation4], 0
    %8 = vsyncpa [#allocation7], 0
    %9 = vsyncpa [#allocation5], 0
    // Predicated region
    $region2: #{tpu_custom_call.1} parent=1 // pred_check
      _
    $region3: #{tpu_custom_call.1} parent=1 // pred_check_branch
      %11 = sbr.rel (0) target = $region5
    $region4: #{tpu_custom_call.1} parent=1 // pred_region
      %s13 = ssub.s32 1024, 1024
      %14 = vsyncadd [#allocation4], %s13
      %s15 = sshll.u32 [#allocation3], 4
      %s16 = int_to_ptr.vmem [resolvable:$true] %s15
      %21 = dma.hbm_to_vmem [thread:$0]  %s0, 1024, %s16, [#allocation4], 64, 64, 4
    $region5: #{tpu_custom_call.1} parent=1 // pred_fallthru
      _
    // Predicated region
    $region6: #{tpu_custom_call.1} parent=1 // pred_check
      _
    $region7: #{tpu_custom_call.1} parent=1 // pred_check_branch
      %23 = sbr.rel (0) target = $region9
    $region8: #{tpu_custom_call.1} parent=1 // pred_region
      %s25 = ssub.s32 1024, 1024
      %26 = vsyncadd [#allocation7], %s25
      %s27 = sshll.u32 [#allocation6], 4
      %s28 = int_to_ptr.vmem [resolvable:$true] %s27
      %33 = dma.hbm_to_vmem [thread:$0]  %s1, 1024, %s28, [#allocation7], 64, 64, 4
    $region9: #{tpu_custom_call.1} parent=1 // pred_fallthru
      _
    // Predicated region
    $region10: #{tpu_custom_call.1} parent=1 // pred_check
      _
    $region11: #{tpu_custom_call.1} parent=1 // pred_check_branch
      %35 = sbr.rel (0) target = $region13
    $region12: #{tpu_custom_call.1} parent=1 // pred_region
      %36 = dma.done [#allocation4], 1024
    $region13: #{tpu_custom_call.1} parent=1 // pred_fallthru
      _
    // Predicated region
    $region14: #{tpu_custom_call.1} parent=1 // pred_check
      _
    $region15: #{tpu_custom_call.1} parent=1 // pred_check_branch
      %38 = sbr.rel (0) target = $region17
    $region16: #{tpu_custom_call.1} parent=1 // pred_region
      %39 = dma.done [#allocation7], 1024
    $region17: #{tpu_custom_call.1} parent=1 // pred_fallthru
      _
    %p41 = scmp.eq.s32.totalorder 0, 0
    // Predicated region
    $region18: #{tpu_custom_call.1} parent=1 // pred_check
      %p42 = pneg %p41
    $region19: #{tpu_custom_call.1} parent=1 // pred_check_branch
      %44 = sbr.rel (%p42) target = $region21
    $region20: #{tpu_custom_call.1} parent=1 // pred_region
      %45 = vst [vmem:[#allocation2] sm:$0xff] 0.0
      %46 = vst [vmem:[#allocation2 + $0x8] sm:$0xff] 0.0
      %47 = vst [vmem:[#allocation2 + $0x10] sm:$0xff] 0.0
      %48 = vst [vmem:[#allocation2 + $0x18] sm:$0xff] 0.0
      %49 = vst [vmem:[#allocation2 + $0x20] sm:$0xff] 0.0
      %50 = vst [vmem:[#allocation2 + $0x28] sm:$0xff] 0.0
      %51 = vst [vmem:[#allocation2 + $0x30] sm:$0xff] 0.0
      %52 = vst [vmem:[#allocation2 + $0x38] sm:$0xff] 0.0
      %53 = vst [vmem:[#allocation2 + $0x40] sm:$0xff] 0.0
      %54 = vst [vmem:[#allocation2 + $0x48] sm:$0xff] 0.0
      %55 = vst [vmem:[#allocation2 + $0x50] sm:$0xff] 0.0
      %56 = vst [vmem:[#allocation2 + $0x58] sm:$0xff] 0.0
      %57 = vst [vmem:[#allocation2 + $0x60] sm:$0xff] 0.0
      %58 = vst [vmem:[#allocation2 + $0x68] sm:$0xff] 0.0
      %59 = vst [vmem:[#allocation2 + $0x70] sm:$0xff] 0.0
      %60 = vst [vmem:[#allocation2 + $0x78] sm:$0xff] 0.0
    $region21: #{tpu_custom_call.1} parent=1 // pred_fallthru
      _
    %v61 = vld [vmem:[#allocation2] sm:$0xff]
    %v62 = vld [vmem:[#allocation2 + $0x8] sm:$0xff]
    %v63 = vld [vmem:[#allocation2 + $0x10] sm:$0xff]
    %v64 = vld [vmem:[#allocation2 + $0x18] sm:$0xff]
    %v65 = vld [vmem:[#allocation2 + $0x20] sm:$0xff]
    %v66 = vld [vmem:[#allocation2 + $0x28] sm:$0xff]
    %v67 = vld [vmem:[#allocation2 + $0x30] sm:$0xff]
    %v68 = vld [vmem:[#allocation2 + $0x38] sm:$0xff]
    %v69 = vld [vmem:[#allocation2 + $0x40] sm:$0xff]
    %v70 = vld [vmem:[#allocation2 + $0x48] sm:$0xff]
    %v71 = vld [vmem:[#allocation2 + $0x50] sm:$0xff]
    %v72 = vld [vmem:[#allocation2 + $0x58] sm:$0xff]
    %v73 = vld [vmem:[#allocation2 + $0x60] sm:$0xff]
    %v74 = vld [vmem:[#allocation2 + $0x68] sm:$0xff]
    %v75 = vld [vmem:[#allocation2 + $0x70] sm:$0xff]
    %v76 = vld [vmem:[#allocation2 + $0x78] sm:$0xff]
    %v77 = vld [vmem:[#allocation3] sm:$0xf]
    %v78 = vld [vmem:[#allocation3 + $0x4] sm:$0xf]
    %v79 = vld [vmem:[#allocation3 + $0x8] sm:$0xf]
    %v80 = vld [vmem:[#allocation3 + $0xc] sm:$0xf]
    %v81 = vld [vmem:[#allocation3 + $0x10] sm:$0xf]
    %v82 = vld [vmem:[#allocation3 + $0x14] sm:$0xf]
    %v83 = vld [vmem:[#allocation3 + $0x18] sm:$0xf]
    %v84 = vld [vmem:[#allocation3 + $0x1c] sm:$0xf]
    %v85 = vld [vmem:[#allocation3 + $0x20] sm:$0xf]
    %v86 = vld [vmem:[#allocation3 + $0x24] sm:$0xf]
    %v87 = vld [vmem:[#allocation3 + $0x28] sm:$0xf]
    %v88 = vld [vmem:[#allocation3 + $0x2c] sm:$0xf]
    %v89 = vld [vmem:[#allocation3 + $0x30] sm:$0xf]
    %v90 = vld [vmem:[#allocation3 + $0x34] sm:$0xf]
    %v91 = vld [vmem:[#allocation3 + $0x38] sm:$0xf]
    %v92 = vld [vmem:[#allocation3 + $0x3c] sm:$0xf]
    %v93 = vld [vmem:[#allocation6] sm:$0xf]
    %v94 = vld [vmem:[#allocation6 + $0x4] sm:$0xf]
    %v95 = vld [vmem:[#allocation6 + $0x8] sm:$0xf]
    %v96 = vld [vmem:[#allocation6 + $0xc] sm:$0xf]
    %v97 = vld [vmem:[#allocation6 + $0x10] sm:$0xf]
    %v98 = vld [vmem:[#allocation6 + $0x14] sm:$0xf]
    %v99 = vld [vmem:[#allocation6 + $0x18] sm:$0xf]
    %v100 = vld [vmem:[#allocation6 + $0x1c] sm:$0xf]
    %v101 = vld [vmem:[#allocation6 + $0x20] sm:$0xf]
    %v102 = vld [vmem:[#allocation6 + $0x24] sm:$0xf]
    %v103 = vld [vmem:[#allocation6 + $0x28] sm:$0xf]
    %v104 = vld [vmem:[#allocation6 + $0x2c] sm:$0xf]
    %v105 = vld [vmem:[#allocation6 + $0x30] sm:$0xf]
    %v106 = vld [vmem:[#allocation6 + $0x34] sm:$0xf]
    %v107 = vld [vmem:[#allocation6 + $0x38] sm:$0xf]
    %v108 = vld [vmem:[#allocation6 + $0x3c] sm:$0xf]
    %v125 = vunpack.c.l.b16 %v77
    %v126 = vunpack.c.l.b16 %v78
    %v127 = vunpack.c.l.b16 %v79
    %v128 = vunpack.c.l.b16 %v80
    %v129 = vunpack.c.l.b16 %v81
    %v130 = vunpack.c.l.b16 %v82
    %v131 = vunpack.c.l.b16 %v83
    %v132 = vunpack.c.l.b16 %v84
    %v133 = vunpack.c.l.b16 %v85
    %v134 = vunpack.c.l.b16 %v86
    %v135 = vunpack.c.l.b16 %v87
    %v136 = vunpack.c.l.b16 %v88
    %v137 = vunpack.c.l.b16 %v89
    %v138 = vunpack.c.l.b16 %v90
    %v139 = vunpack.c.l.b16 %v91
    %v140 = vunpack.c.l.b16 %v92
    %v141 = vpack.c.b16 %v126, %v125
    %v142 = vpack.c.b16 %v128, %v127
    %v143 = vpack.c.b16 %v130, %v129
    %v144 = vpack.c.b16 %v132, %v131
    %v145 = vpack.c.b16 %v134, %v133
    %v146 = vpack.c.b16 %v136, %v135
    %v147 = vpack.c.b16 %v138, %v137
    %v148 = vpack.c.b16 %v140, %v139
    %v173 = vunpack.c.l.b16 %v93
    %v174 = vunpack.c.l.b16 %v94
    %v175 = vunpack.c.l.b16 %v95
    %v176 = vunpack.c.l.b16 %v96
    %v177 = vunpack.c.l.b16 %v97
    %v178 = vunpack.c.l.b16 %v98
    %v179 = vunpack.c.l.b16 %v99
    %v180 = vunpack.c.l.b16 %v100
    %v181 = vunpack.c.l.b16 %v101
    %v182 = vunpack.c.l.b16 %v102
    %v183 = vunpack.c.l.b16 %v103
    %v184 = vunpack.c.l.b16 %v104
    %v185 = vunpack.c.l.b16 %v105
    %v186 = vunpack.c.l.b16 %v106
    %v187 = vunpack.c.l.b16 %v107
    %v188 = vunpack.c.l.b16 %v108
    %v189 = vpack.c.b16 %v174, %v173
    %v190 = vpack.c.b16 %v176, %v175
    %v191 = vpack.c.b16 %v178, %v177
    %v192 = vpack.c.b16 %v180, %v179
    %v193 = vpack.c.b16 %v182, %v181
    %v194 = vpack.c.b16 %v184, %v183
    %v195 = vpack.c.b16 %v186, %v185
    %v196 = vpack.c.b16 %v188, %v187
    %205 = vmatprep.subr.bf16.mxu0 0
    %206 = vmatpush1.bf16.msra.mxu0 %v189
    %207 = vmatprep.subr.bf16.mxu0 0
    %208 = vmatpush1.bf16.msra.mxu0 %v190
    %209 = vmatprep.subr.bf16.mxu0 0
    %210 = vmatpush1.bf16.msra.mxu0 %v191
    %211 = vmatprep.subr.bf16.mxu0 0
    %212 = vmatpush1.bf16.msra.mxu0 %v192
    %213 = vmatprep.subr.bf16.mxu0 0
    %214 = vmatpush1.bf16.msra.mxu0 %v193
    %215 = vmatprep.subr.bf16.mxu0 0
    %216 = vmatpush1.bf16.msra.mxu0 %v194
    %217 = vmatprep.subr.bf16.mxu0 0
    %218 = vmatpush1.bf16.msra.mxu0 %v195
    %219 = vmatprep.subr.bf16.mxu0 0
    %220 = vmatpush1.bf16.msra.mxu0 %v196
    %221 = vmatprep.subr.bf16.mxu0 0
    %222 = vmatpush1.bf16.msra.mxu0 0
    %223 = vmatprep.subr.bf16.mxu0 0
    %224 = vmatpush1.bf16.msra.mxu0 0
    %225 = vmatprep.subr.bf16.mxu0 0
    %226 = vmatpush1.bf16.msra.mxu0 0
    %227 = vmatprep.subr.bf16.mxu0 0
    %228 = vmatpush1.bf16.msra.mxu0 0
    %229 = vmatprep.subr.bf16.mxu0 0
    %230 = vmatpush1.bf16.msra.mxu0 0
    %231 = vmatprep.subr.bf16.mxu0 0
    %232 = vmatpush1.bf16.msra.mxu0 0
    %233 = vmatprep.subr.bf16.mxu0 0
    %234 = vmatpush1.bf16.msra.mxu0 0
    %235 = vmatprep.subr.bf16.mxu0 0
    %236 = vmatpush1.bf16.msra.mxu0 0
    %237 = vmatprep.mubr.bf16.mxu0 0
    %238 = vmatmul.mubr.bf16.gmra.mrb[0].mxu0 %v141
    %v239 = vpop.f32.mrb[0].mxu0
    %v240 = vadd.f32 0.0, %v239
    %v241 = vpop.f32.mrb[0].mxu0
    %v242 = vpop.f32.mrb[0].mxu0
    %v243 = vadd.f32 0.0, %v242
    %v244 = vpop.f32.mrb[0].mxu0
    %245 = vmatprep.mubr.bf16.mxu0 0
    %246 = vmatmul.mubr.bf16.gmra.mrb[0].mxu0 %v142
    %v247 = vpop.f32.mrb[0].mxu0
    %v248 = vadd.f32 0.0, %v247
    %v249 = vpop.f32.mrb[0].mxu0
    %v250 = vpop.f32.mrb[0].mxu0
    %v251 = vadd.f32 0.0, %v250
    %v252 = vpop.f32.mrb[0].mxu0
    %253 = vmatprep.mubr.bf16.mxu0 0
    %254 = vmatmul.mubr.bf16.gmra.mrb[0].mxu0 %v143
    %v255 = vpop.f32.mrb[0].mxu0
    %v256 = vadd.f32 0.0, %v255
    %v257 = vpop.f32.mrb[0].mxu0
    %v258 = vpop.f32.mrb[0].mxu0
    %v259 = vadd.f32 0.0, %v258
    %v260 = vpop.f32.mrb[0].mxu0
    %261 = vmatprep.mubr.bf16.mxu0 0
    %262 = vmatmul.mubr.bf16.gmra.mrb[0].mxu0 %v144
    %v263 = vpop.f32.mrb[0].mxu0
    %v264 = vadd.f32 0.0, %v263
    %v265 = vpop.f32.mrb[0].mxu0
    %v266 = vpop.f32.mrb[0].mxu0
    %v267 = vadd.f32 0.0, %v266
    %v268 = vpop.f32.mrb[0].mxu0
    %269 = vmatprep.mubr.bf16.mxu0 0
    %270 = vmatmul.mubr.bf16.gmra.mrb[0].mxu0 %v145
    %v271 = vpop.f32.mrb[0].mxu0
    %v272 = vadd.f32 0.0, %v271
    %v273 = vpop.f32.mrb[0].mxu0
    %v274 = vpop.f32.mrb[0].mxu0
    %v275 = vadd.f32 0.0, %v274
    %v276 = vpop.f32.mrb[0].mxu0
    %277 = vmatprep.mubr.bf16.mxu0 0
    %278 = vmatmul.mubr.bf16.gmra.mrb[0].mxu0 %v146
    %v279 = vpop.f32.mrb[0].mxu0
    %v280 = vadd.f32 0.0, %v279
    %v281 = vpop.f32.mrb[0].mxu0
    %v282 = vpop.f32.mrb[0].mxu0
    %v283 = vadd.f32 0.0, %v282
    %v284 = vpop.f32.mrb[0].mxu0
    %285 = vmatprep.mubr.bf16.mxu0 0
    %286 = vmatmul.mubr.bf16.gmra.mrb[0].mxu0 %v147
    %v287 = vpop.f32.mrb[0].mxu0
    %v288 = vadd.f32 0.0, %v287
    %v289 = vpop.f32.mrb[0].mxu0
    %v290 = vpop.f32.mrb[0].mxu0
    %v291 = vadd.f32 0.0, %v290
    %v292 = vpop.f32.mrb[0].mxu0
    %293 = vmatprep.mubr.bf16.mxu0 0
    %294 = vmatmul.mubr.bf16.gmra.mrb[0].mxu0 %v148
    %v295 = vpop.f32.mrb[0].mxu0
    %v296 = vadd.f32 0.0, %v295
    %v297 = vpop.f32.mrb[0].mxu0
    %v298 = vpop.f32.mrb[0].mxu0
    %v299 = vadd.f32 0.0, %v298
    %v300 = vpop.f32.mrb[0].mxu0
    %301 = vdwg.mxu0
    %v302 = vadd.f32 %v61, %v240
    %v303 = vadd.f32 %v62, %v243
    %v304 = vadd.f32 %v63, %v248
    %v305 = vadd.f32 %v64, %v251
    %v306 = vadd.f32 %v65, %v256
    %v307 = vadd.f32 %v66, %v259
    %v308 = vadd.f32 %v67, %v264
    %v309 = vadd.f32 %v68, %v267
    %v310 = vadd.f32 %v69, %v272
    %v311 = vadd.f32 %v70, %v275
    %v312 = vadd.f32 %v71, %v280
    %v313 = vadd.f32 %v72, %v283
    %v314 = vadd.f32 %v73, %v288
    %v315 = vadd.f32 %v74, %v291
    %v316 = vadd.f32 %v75, %v296
    %v317 = vadd.f32 %v76, %v299
    %318 = vst [vmem:[#allocation2] sm:$0xff] %v302
    %319 = vst [vmem:[#allocation2 + $0x8] sm:$0xff] %v303
    %320 = vst [vmem:[#allocation2 + $0x10] sm:$0xff] %v304
    %321 = vst [vmem:[#allocation2 + $0x18] sm:$0xff] %v305
    %322 = vst [vmem:[#allocation2 + $0x20] sm:$0xff] %v306
    %323 = vst [vmem:[#allocation2 + $0x28] sm:$0xff] %v307
    %324 = vst [vmem:[#allocation2 + $0x30] sm:$0xff] %v308
    %325 = vst [vmem:[#allocation2 + $0x38] sm:$0xff] %v309
    %326 = vst [vmem:[#allocation2 + $0x40] sm:$0xff] %v310
    %327 = vst [vmem:[#allocation2 + $0x48] sm:$0xff] %v311
    %328 = vst [vmem:[#allocation2 + $0x50] sm:$0xff] %v312
    %329 = vst [vmem:[#allocation2 + $0x58] sm:$0xff] %v313
    %330 = vst [vmem:[#allocation2 + $0x60] sm:$0xff] %v314
    %331 = vst [vmem:[#allocation2 + $0x68] sm:$0xff] %v315
    %332 = vst [vmem:[#allocation2 + $0x70] sm:$0xff] %v316
    %333 = vst [vmem:[#allocation2 + $0x78] sm:$0xff] %v317
    // Predicated region
    $region22: #{tpu_custom_call.1} parent=1 // pred_check
      %p334 = pneg %p41
    $region23: #{tpu_custom_call.1} parent=1 // pred_check_branch
      %336 = sbr.rel (%p334) target = $region25
    $region24: #{tpu_custom_call.1} parent=1 // pred_region
      %v337 = vld [vmem:[#allocation2] sm:$0xff]
      %v338 = vld [vmem:[#allocation2 + $0x8] sm:$0xff]
      %v339 = vld [vmem:[#allocation2 + $0x10] sm:$0xff]
      %v340 = vld [vmem:[#allocation2 + $0x18] sm:$0xff]
      %v341 = vld [vmem:[#allocation2 + $0x20] sm:$0xff]
      %v342 = vld [vmem:[#allocation2 + $0x28] sm:$0xff]
      %v343 = vld [vmem:[#allocation2 + $0x30] sm:$0xff]
      %v344 = vld [vmem:[#allocation2 + $0x38] sm:$0xff]
      %v345 = vld [vmem:[#allocation2 + $0x40] sm:$0xff]
      %v346 = vld [vmem:[#allocation2 + $0x48] sm:$0xff]
      %v347 = vld [vmem:[#allocation2 + $0x50] sm:$0xff]
      %v348 = vld [vmem:[#allocation2 + $0x58] sm:$0xff]
      %v349 = vld [vmem:[#allocation2 + $0x60] sm:$0xff]
      %v350 = vld [vmem:[#allocation2 + $0x68] sm:$0xff]
      %v351 = vld [vmem:[#allocation2 + $0x70] sm:$0xff]
      %v352 = vld [vmem:[#allocation2 + $0x78] sm:$0xff]
      %v353 = vpack.c.bf16 %v338, %v337
      %v354 = vpack.c.bf16 %v340, %v339
      %v355 = vpack.c.bf16 %v342, %v341
      %v356 = vpack.c.bf16 %v344, %v343
      %v357 = vpack.c.bf16 %v346, %v345
      %v358 = vpack.c.bf16 %v348, %v347
      %v359 = vpack.c.bf16 %v350, %v349
      %v360 = vpack.c.bf16 %v352, %v351
      %v369 = vunpack.c.l.b16 %v353
      %v370 = vunpack.c.h.b16 %v353
      %v371 = vunpack.c.l.b16 %v354
      %v372 = vunpack.c.h.b16 %v354
      %v373 = vunpack.c.l.b16 %v355
      %v374 = vunpack.c.h.b16 %v355
      %v375 = vunpack.c.l.b16 %v356
      %v376 = vunpack.c.h.b16 %v356
      %v377 = vunpack.c.l.b16 %v357
      %v378 = vunpack.c.h.b16 %v357
      %v379 = vunpack.c.l.b16 %v358
      %v380 = vunpack.c.h.b16 %v358
      %v381 = vunpack.c.l.b16 %v359
      %v382 = vunpack.c.h.b16 %v359
      %v383 = vunpack.c.l.b16 %v360
      %v384 = vunpack.c.h.b16 %v360
      %v385 = vpack.c.b16 %v369, %v369
      %v386 = vpack.c.b16 %v370, %v370
      %v387 = vpack.c.b16 %v371, %v371
      %v388 = vpack.c.b16 %v372, %v372
      %v389 = vpack.c.b16 %v373, %v373
      %v390 = vpack.c.b16 %v374, %v374
      %v391 = vpack.c.b16 %v375, %v375
      %v392 = vpack.c.b16 %v376, %v376
      %v393 = vpack.c.b16 %v377, %v377
      %v394 = vpack.c.b16 %v378, %v378
      %v395 = vpack.c.b16 %v379, %v379
      %v396 = vpack.c.b16 %v380, %v380
      %v397 = vpack.c.b16 %v381, %v381
      %v398 = vpack.c.b16 %v382, %v382
      %v399 = vpack.c.b16 %v383, %v383
      %v400 = vpack.c.b16 %v384, %v384
      %417 = vst [vmem:[#allocation8] sm:$0xf] %v385
      %418 = vst [vmem:[#allocation8 + $0x4] sm:$0xf] %v386
      %419 = vst [vmem:[#allocation8 + $0x8] sm:$0xf] %v387
      %420 = vst [vmem:[#allocation8 + $0xc] sm:$0xf] %v388
      %421 = vst [vmem:[#allocation8 + $0x10] sm:$0xf] %v389
      %422 = vst [vmem:[#allocation8 + $0x14] sm:$0xf] %v390
      %423 = vst [vmem:[#allocation8 + $0x18] sm:$0xf] %v391
      %424 = vst [vmem:[#allocation8 + $0x1c] sm:$0xf] %v392
      %425 = vst [vmem:[#allocation8 + $0x20] sm:$0xf] %v393
      %426 = vst [vmem:[#allocation8 + $0x24] sm:$0xf] %v394
      %427 = vst [vmem:[#allocation8 + $0x28] sm:$0xf] %v395
      %428 = vst [vmem:[#allocation8 + $0x2c] sm:$0xf] %v396
      %429 = vst [vmem:[#allocation8 + $0x30] sm:$0xf] %v397
      %430 = vst [vmem:[#allocation8 + $0x34] sm:$0xf] %v398
      %431 = vst [vmem:[#allocation8 + $0x38] sm:$0xf] %v399
      %432 = vst [vmem:[#allocation8 + $0x3c] sm:$0xf] %v400
    $region25: #{tpu_custom_call.1} parent=1 // pred_fallthru
      _
    // Predicated region
    $region26: #{tpu_custom_call.1} parent=1 // pred_check
      _
    $region27: #{tpu_custom_call.1} parent=1 // pred_check_branch
      %434 = sbr.rel (0) target = $region29
    $region28: #{tpu_custom_call.1} parent=1 // pred_region
      %s436 = ssub.s32 1024, 1024
      %437 = vsyncadd [#allocation5], %s436
      %s438 = sshll.u32 [#allocation8], 4
      %s439 = int_to_ptr.vmem [resolvable:$true] %s438
      %444 = dma.vmem_to_hbm [thread:$0]  %s439, 1024, %s2, [#allocation5], 64, 64, 4
    $region29: #{tpu_custom_call.1} parent=1 // pred_fallthru
      _
    // Predicated region
    $region30: #{tpu_custom_call.1} parent=1 // pred_check
      _
    $region31: #{tpu_custom_call.1} parent=1 // pred_check_branch
      %446 = sbr.rel (0) target = $region33
    $region32: #{tpu_custom_call.1} parent=1 // pred_region
      %447 = dma.done [#allocation5], 1024
    $region33: #{tpu_custom_call.1} parent=1 // pred_fallthru
      _
    %448 = vsyncpa [#allocation4], 1
    %449 = vsyncpa [#allocation7], 1
    %450 = vsyncpa [#allocation5], 1

</llo_original>
